<compile_context>
chip_gen: v6e
topology: v6e:2x2x1
jax: 0.10.0
libtpu: 0.0.40
codegen_flags: <defaults>
</compile_context>

<pallas_src>
import jax
import jax.numpy as jnp
from jax.experimental import pallas as pl
from jax.experimental.pallas import tpu as pltpu


def _round_up(x, m):
    return ((x + m - 1) // m) * m


def _cdiv(a, b):
    return (a + b - 1) // b


def generator_kernel(x_ref, w1_ref, b1_ref, w2_ref, b2_ref, w3_ref, b3_ref, out_ref):
    # map1 + tanh
    h = jnp.tanh(
        jnp.dot(x_ref[...], w1_ref[...], preferred_element_type=jnp.float32)
        + b1_ref[...]
    )
    # map2_1 .. map2_8 (relu x4, tanh x4) -- statically unrolled.
    # Per-layer static ref slices (zero-cost views); NOT hoisted into a single
    # (8,H,H) vreg-resident load, to avoid spilling the 64-entry vreg file at
    # large batch tiles. The 3 vld slots/cycle hide each (H,H) tile load.
    for i in range(8):
        z = jnp.dot(h, w2_ref[i], preferred_element_type=jnp.float32) + b2_ref[i]
        h = jnp.maximum(z, 0.0) if i < 4 else jnp.tanh(z)
    # map3_own (no activation); w3/b3 are zero-padded to a lane-dense width so
    # this store is an unmasked full-width vst.
    out_ref[...] = (
        jnp.dot(h, w3_ref[...], preferred_element_type=jnp.float32) + b3_ref[...]
    ).astype(out_ref.dtype)


def generator_forward(x, params, *, block_b=2048):
    w1, b1, w2, b2, w3, b3 = params
    B, in_size = x.shape
    H = w1.shape[1]
    out_size = w3.shape[1]

    # Lane-dense output: pad the final layer to a multiple of 128 lanes.
    out_pad = _round_up(out_size, 128)
    w3p = jnp.pad(w3, ((0, 0), (0, out_pad - out_size)))
    b3p = jnp.pad(b3, ((0, 0), (0, out_pad - out_size)))

    # Near-divisor batch tiling:
    #   * pad B only to a multiple of 8 sublanes (not a multiple of tb);
    #   * >=2 tiles whenever B > 8 so v7x's two TensorCores both get work
    #     via the "parallel" grid axis (no-op on single-TC v5e/v6e);
    #   * tiles as large as block_b to amortize per-grid-step overhead.
    b8 = _round_up(B, 8)
    n_tiles = max(_cdiv(b8, block_b), 2 if b8 > 8 else 1)
    tb = _round_up(_cdiv(b8, n_tiles), 8)
    b_padded = n_tiles * tb
    if b_padded != B:
        x = jnp.pad(x, ((0, b_padded - B), (0, 0)))
    grid = (n_tiles,)

    # Weights/biases: constant index_map -> DMA'd once, resident across tiles.
    const2 = lambda i: (0, 0)
    const3 = lambda i: (0, 0, 0)
    in_specs = [
        pl.BlockSpec((tb, in_size), lambda i: (i, 0)),  # x (batch-tiled)
        pl.BlockSpec((in_size, H), const2),             # w1
        pl.BlockSpec((1, H), const2),                   # b1
        pl.BlockSpec((8, H, H), const3),                # w2 stack
        pl.BlockSpec((8, 1, H), const3),                # b2 stack
        pl.BlockSpec((H, out_pad), const2),             # w3 (lane-padded)
        pl.BlockSpec((1, out_pad), const2),             # b3 (lane-padded)
    ]
    out_spec = pl.BlockSpec((tb, out_pad), lambda i: (i, 0))

    flops = 2 * b_padded * (in_size * H + 8 * H * H + H * out_pad)
    transcendentals = 5 * b_padded * H  # tanh after map1 + 4 tanh hidden layers
    bytes_accessed = 4 * (
        b_padded * in_size
        + b_padded * out_pad
        + in_size * H + H
        + 8 * H * H + 8 * H
        + H * out_pad + out_pad
    )

    out_padded = pl.pallas_call(
        generator_kernel,
        out_shape=jax.ShapeDtypeStruct((b_padded, out_pad), x.dtype),
        grid=grid,
        in_specs=in_specs,
        out_specs=out_spec,
        compiler_params=pltpu.CompilerParams(
            # Batch tiles are independent -> shard across v7x's 2 TensorCores.
            dimension_semantics=("parallel",),
        ),
        cost_estimate=pl.CostEstimate(
            flops=flops,
            transcendentals=transcendentals,
            bytes_accessed=bytes_accessed,
        ),
    )(x, w1, b1, w2, b2, w3p, b3p)
    return out_padded[:B, :out_size]


def init_params(key, input_size, hidden_size, output_size):
    """Deterministic init mimicking PyTorch Linear default U(-1/sqrt(fan_in), +)."""

    def linear(k, fan_in, fan_out):
        kw, kb = jax.random.split(k)
        bound = 1.0 / jnp.sqrt(jnp.float32(fan_in))
        # stored already transposed: (in, out)
        w = jax.random.uniform(kw, (fan_in, fan_out), jnp.float32, -bound, bound)
        b = jax.random.uniform(kb, (1, fan_out), jnp.float32, -bound, bound)
        return w, b

    keys = jax.random.split(key, 10)
    w1, b1 = linear(keys[0], input_size, hidden_size)
    w2s, b2s = [], []
    for i in range(8):
        w, b = linear(keys[1 + i], hidden_size, hidden_size)
        w2s.append(w)
        b2s.append(b)
    w2 = jnp.stack(w2s, axis=0)  # (8, H, H)
    b2 = jnp.stack(b2s, axis=0)  # (8, 1, H)
    w3, b3 = linear(keys[9], hidden_size, output_size)
    return w1, b1, w2, b2, w3, b3


def reference_forward(x, params):
    w1, b1, w2, b2, w3, b3 = params
    h = jnp.tanh(x @ w1 + b1)
    for i in range(8):
        z = h @ w2[i] + b2[i]
        h = jnp.maximum(z, 0.0) if i < 4 else jnp.tanh(z)
    return h @ w3 + b3


if __name__ == "__main__":
    input_size, hidden_size, output_size = 16, 32, 8
    batch = 8

    key = jax.random.PRNGKey(0)
    kx, kp = jax.random.split(key)
    x = jax.random.normal(kx, (batch, input_size), jnp.float32)
    params = init_params(kp, input_size, hidden_size, output_size)

    out = generator_forward(x, params)
    out = jax.block_until_ready(out)

    ref = reference_forward(x, params)
    assert out.shape == (batch, output_size)
    assert jnp.allclose(out, ref, atol=1e-5, rtol=1e-5)

    # Multi-tile / non-multiple-of-8 batch: exercises the near-divisor tiling
    # (B=300 -> 3 tiles of 104 rows, only 12 padded rows) and the grid path.
    x_big = jax.random.normal(kx, (300, input_size), jnp.float32)
    out_big = jax.block_until_ready(generator_forward(x_big, params, block_b=128))
    ref_big = reference_forward(x_big, params)
    assert out_big.shape == (300, output_size)
    assert jnp.allclose(out_big, ref_big, atol=1e-5, rtol=1e-5)

    print("KERNEL_OK")
</pallas_src>

<mosaic_0001>
module attributes {stable_mosaic.version = 11 : i64} {
  func.func @generator_kernel(%arg0: i32, %arg1: memref<8x16xf32, #tpu.memory_space<vmem>>, %arg2: memref<16x32xf32, #tpu.memory_space<vmem>>, %arg3: memref<1x32xf32, #tpu.memory_space<vmem>>, %arg4: memref<8x32x32xf32, #tpu.memory_space<vmem>>, %arg5: memref<8x1x32xf32, #tpu.memory_space<vmem>>, %arg6: memref<32x128xf32, #tpu.memory_space<vmem>>, %arg7: memref<1x128xf32, #tpu.memory_space<vmem>>, %arg8: memref<8x128xf32, #tpu.memory_space<vmem>>) attributes {dimension_semantics = [#tpu.dimension_semantics<parallel>], iteration_bounds = array<i64: 1>, scalar_prefetch = 0 : i64, scratch_operands = 0 : i64, tpu.core_type = #tpu.core_type<tc>, window_params = [{transform_indices = @transform_0, window_bounds = array<i64: 8, 16>}, {pipeline_mode = #tpu.pipeline_mode<synchronous>, transform_indices = @transform_1, window_bounds = array<i64: 16, 32>}, {pipeline_mode = #tpu.pipeline_mode<synchronous>, transform_indices = @transform_2, window_bounds = array<i64: 1, 32>}, {pipeline_mode = #tpu.pipeline_mode<synchronous>, transform_indices = @transform_3, window_bounds = array<i64: 8, 32, 32>}, {pipeline_mode = #tpu.pipeline_mode<synchronous>, transform_indices = @transform_4, window_bounds = array<i64: 8, 1, 32>}, {pipeline_mode = #tpu.pipeline_mode<synchronous>, transform_indices = @transform_5, window_bounds = array<i64: 32, 128>}, {pipeline_mode = #tpu.pipeline_mode<synchronous>, transform_indices = @transform_6, window_bounds = array<i64: 1, 128>}, {transform_indices = @transform_7, window_bounds = array<i64: 8, 128>}]} {
    %c0 = arith.constant 0 : index
    %c0_0 = arith.constant 0 : index
    %0 = vector.load %arg1[%c0, %c0_0] : memref<8x16xf32, #tpu.memory_space<vmem>>, vector<8x16xf32>
    %c0_1 = arith.constant 0 : index
    %c0_2 = arith.constant 0 : index
    %1 = vector.load %arg2[%c0_1, %c0_2] : memref<16x32xf32, #tpu.memory_space<vmem>>, vector<16x32xf32>
    %cst = arith.constant dense<0.000000e+00> : vector<8x32xf32>
    %2 = tpu.matmul %0, %1, %cst {dimension_numbers = #tpu.dot_dimension_numbers<[1], [0], [0], [1], [0, 0, 1, 1], [], []>} : vector<8x16xf32>, vector<16x32xf32>, vector<8x32xf32> -> vector<8x32xf32>
    %c0_3 = arith.constant 0 : index
    %c0_4 = arith.constant 0 : index
    %3 = vector.load %arg3[%c0_3, %c0_4] : memref<1x32xf32, #tpu.memory_space<vmem>>, vector<1x32xf32>
    %4 = vector.broadcast %3 : vector<1x32xf32> to vector<8x32xf32>
    %5 = arith.addf %2, %4 : vector<8x32xf32>
    %6 = math.tanh %5 : vector<8x32xf32>
    %c0_5 = arith.constant 0 : index
    %c0_6 = arith.constant 0 : index
    %c0_7 = arith.constant 0 : index
    %7 = vector.load %arg4[%c0_5, %c0_6, %c0_7] : memref<8x32x32xf32, #tpu.memory_space<vmem>>, vector<1x32x32xf32>
    %8 = vector.shape_cast %7 : vector<1x32x32xf32> to vector<32x32xf32>
    %cst_8 = arith.constant dense<0.000000e+00> : vector<8x32xf32>
    %9 = tpu.matmul %6, %8, %cst_8 {dimension_numbers = #tpu.dot_dimension_numbers<[1], [0], [0], [1], [0, 0, 1, 1], [], []>} : vector<8x32xf32>, vector<32x32xf32>, vector<8x32xf32> -> vector<8x32xf32>
    %c0_9 = arith.constant 0 : index
    %c0_10 = arith.constant 0 : index
    %c0_11 = arith.constant 0 : index
    %10 = vector.load %arg5[%c0_9, %c0_10, %c0_11] : memref<8x1x32xf32, #tpu.memory_space<vmem>>, vector<1x1x32xf32>
    %11 = vector.shape_cast %10 : vector<1x1x32xf32> to vector<1x32xf32>
    %12 = vector.broadcast %11 : vector<1x32xf32> to vector<8x32xf32>
    %13 = arith.addf %9, %12 : vector<8x32xf32>
    %cst_12 = arith.constant 0.000000e+00 : f32
    %14 = vector.broadcast %cst_12 : f32 to vector<8x32xf32>
    %15 = arith.maximumf %13, %14 : vector<8x32xf32>
    %c1 = arith.constant 1 : index
    %c0_13 = arith.constant 0 : index
    %c0_14 = arith.constant 0 : index
    %16 = vector.load %arg4[%c1, %c0_13, %c0_14] : memref<8x32x32xf32, #tpu.memory_space<vmem>>, vector<1x32x32xf32>
    %17 = vector.shape_cast %16 : vector<1x32x32xf32> to vector<32x32xf32>
    %cst_15 = arith.constant dense<0.000000e+00> : vector<8x32xf32>
    %18 = tpu.matmul %15, %17, %cst_15 {dimension_numbers = #tpu.dot_dimension_numbers<[1], [0], [0], [1], [0, 0, 1, 1], [], []>} : vector<8x32xf32>, vector<32x32xf32>, vector<8x32xf32> -> vector<8x32xf32>
    %c1_16 = arith.constant 1 : index
    %c0_17 = arith.constant 0 : index
    %c0_18 = arith.constant 0 : index
    %19 = vector.load %arg5[%c1_16, %c0_17, %c0_18] : memref<8x1x32xf32, #tpu.memory_space<vmem>>, vector<1x1x32xf32>
    %20 = vector.shape_cast %19 : vector<1x1x32xf32> to vector<1x32xf32>
    %21 = vector.broadcast %20 : vector<1x32xf32> to vector<8x32xf32>
    %22 = arith.addf %18, %21 : vector<8x32xf32>
    %cst_19 = arith.constant 0.000000e+00 : f32
    %23 = vector.broadcast %cst_19 : f32 to vector<8x32xf32>
    %24 = arith.maximumf %22, %23 : vector<8x32xf32>
    %c2 = arith.constant 2 : index
    %c0_20 = arith.constant 0 : index
    %c0_21 = arith.constant 0 : index
    %25 = vector.load %arg4[%c2, %c0_20, %c0_21] : memref<8x32x32xf32, #tpu.memory_space<vmem>>, vector<1x32x32xf32>
    %26 = vector.shape_cast %25 : vector<1x32x32xf32> to vector<32x32xf32>
    %cst_22 = arith.constant dense<0.000000e+00> : vector<8x32xf32>
    %27 = tpu.matmul %24, %26, %cst_22 {dimension_numbers = #tpu.dot_dimension_numbers<[1], [0], [0], [1], [0, 0, 1, 1], [], []>} : vector<8x32xf32>, vector<32x32xf32>, vector<8x32xf32> -> vector<8x32xf32>
    %c2_23 = arith.constant 2 : index
    %c0_24 = arith.constant 0 : index
    %c0_25 = arith.constant 0 : index
    %28 = vector.load %arg5[%c2_23, %c0_24, %c0_25] : memref<8x1x32xf32, #tpu.memory_space<vmem>>, vector<1x1x32xf32>
    %29 = vector.shape_cast %28 : vector<1x1x32xf32> to vector<1x32xf32>
    %30 = vector.broadcast %29 : vector<1x32xf32> to vector<8x32xf32>
    %31 = arith.addf %27, %30 : vector<8x32xf32>
    %cst_26 = arith.constant 0.000000e+00 : f32
    %32 = vector.broadcast %cst_26 : f32 to vector<8x32xf32>
    %33 = arith.maximumf %31, %32 : vector<8x32xf32>
    %c3 = arith.constant 3 : index
    %c0_27 = arith.constant 0 : index
    %c0_28 = arith.constant 0 : index
    %34 = vector.load %arg4[%c3, %c0_27, %c0_28] : memref<8x32x32xf32, #tpu.memory_space<vmem>>, vector<1x32x32xf32>
    %35 = vector.shape_cast %34 : vector<1x32x32xf32> to vector<32x32xf32>
    %cst_29 = arith.constant dense<0.000000e+00> : vector<8x32xf32>
    %36 = tpu.matmul %33, %35, %cst_29 {dimension_numbers = #tpu.dot_dimension_numbers<[1], [0], [0], [1], [0, 0, 1, 1], [], []>} : vector<8x32xf32>, vector<32x32xf32>, vector<8x32xf32> -> vector<8x32xf32>
    %c3_30 = arith.constant 3 : index
    %c0_31 = arith.constant 0 : index
    %c0_32 = arith.constant 0 : index
    %37 = vector.load %arg5[%c3_30, %c0_31, %c0_32] : memref<8x1x32xf32, #tpu.memory_space<vmem>>, vector<1x1x32xf32>
    %38 = vector.shape_cast %37 : vector<1x1x32xf32> to vector<1x32xf32>
    %39 = vector.broadcast %38 : vector<1x32xf32> to vector<8x32xf32>
    %40 = arith.addf %36, %39 : vector<8x32xf32>
    %cst_33 = arith.constant 0.000000e+00 : f32
    %41 = vector.broadcast %cst_33 : f32 to vector<8x32xf32>
    %42 = arith.maximumf %40, %41 : vector<8x32xf32>
    %c4 = arith.constant 4 : index
    %c0_34 = arith.constant 0 : index
    %c0_35 = arith.constant 0 : index
    %43 = vector.load %arg4[%c4, %c0_34, %c0_35] : memref<8x32x32xf32, #tpu.memory_space<vmem>>, vector<1x32x32xf32>
    %44 = vector.shape_cast %43 : vector<1x32x32xf32> to vector<32x32xf32>
    %cst_36 = arith.constant dense<0.000000e+00> : vector<8x32xf32>
    %45 = tpu.matmul %42, %44, %cst_36 {dimension_numbers = #tpu.dot_dimension_numbers<[1], [0], [0], [1], [0, 0, 1, 1], [], []>} : vector<8x32xf32>, vector<32x32xf32>, vector<8x32xf32> -> vector<8x32xf32>
    %c4_37 = arith.constant 4 : index
    %c0_38 = arith.constant 0 : index
    %c0_39 = arith.constant 0 : index
    %46 = vector.load %arg5[%c4_37, %c0_38, %c0_39] : memref<8x1x32xf32, #tpu.memory_space<vmem>>, vector<1x1x32xf32>
    %47 = vector.shape_cast %46 : vector<1x1x32xf32> to vector<1x32xf32>
    %48 = vector.broadcast %47 : vector<1x32xf32> to vector<8x32xf32>
    %49 = arith.addf %45, %48 : vector<8x32xf32>
    %50 = math.tanh %49 : vector<8x32xf32>
    %c5 = arith.constant 5 : index
    %c0_40 = arith.constant 0 : index
    %c0_41 = arith.constant 0 : index
    %51 = vector.load %arg4[%c5, %c0_40, %c0_41] : memref<8x32x32xf32, #tpu.memory_space<vmem>>, vector<1x32x32xf32>
    %52 = vector.shape_cast %51 : vector<1x32x32xf32> to vector<32x32xf32>
    %cst_42 = arith.constant dense<0.000000e+00> : vector<8x32xf32>
    %53 = tpu.matmul %50, %52, %cst_42 {dimension_numbers = #tpu.dot_dimension_numbers<[1], [0], [0], [1], [0, 0, 1, 1], [], []>} : vector<8x32xf32>, vector<32x32xf32>, vector<8x32xf32> -> vector<8x32xf32>
    %c5_43 = arith.constant 5 : index
    %c0_44 = arith.constant 0 : index
    %c0_45 = arith.constant 0 : index
    %54 = vector.load %arg5[%c5_43, %c0_44, %c0_45] : memref<8x1x32xf32, #tpu.memory_space<vmem>>, vector<1x1x32xf32>
    %55 = vector.shape_cast %54 : vector<1x1x32xf32> to vector<1x32xf32>
    %56 = vector.broadcast %55 : vector<1x32xf32> to vector<8x32xf32>
    %57 = arith.addf %53, %56 : vector<8x32xf32>
    %58 = math.tanh %57 : vector<8x32xf32>
    %c6 = arith.constant 6 : index
    %c0_46 = arith.constant 0 : index
    %c0_47 = arith.constant 0 : index
    %59 = vector.load %arg4[%c6, %c0_46, %c0_47] : memref<8x32x32xf32, #tpu.memory_space<vmem>>, vector<1x32x32xf32>
    %60 = vector.shape_cast %59 : vector<1x32x32xf32> to vector<32x32xf32>
    %cst_48 = arith.constant dense<0.000000e+00> : vector<8x32xf32>
    %61 = tpu.matmul %58, %60, %cst_48 {dimension_numbers = #tpu.dot_dimension_numbers<[1], [0], [0], [1], [0, 0, 1, 1], [], []>} : vector<8x32xf32>, vector<32x32xf32>, vector<8x32xf32> -> vector<8x32xf32>
    %c6_49 = arith.constant 6 : index
    %c0_50 = arith.constant 0 : index
    %c0_51 = arith.constant 0 : index
    %62 = vector.load %arg5[%c6_49, %c0_50, %c0_51] : memref<8x1x32xf32, #tpu.memory_space<vmem>>, vector<1x1x32xf32>
    %63 = vector.shape_cast %62 : vector<1x1x32xf32> to vector<1x32xf32>
    %64 = vector.broadcast %63 : vector<1x32xf32> to vector<8x32xf32>
    %65 = arith.addf %61, %64 : vector<8x32xf32>
    %66 = math.tanh %65 : vector<8x32xf32>
    %c7 = arith.constant 7 : index
    %c0_52 = arith.constant 0 : index
    %c0_53 = arith.constant 0 : index
    %67 = vector.load %arg4[%c7, %c0_52, %c0_53] : memref<8x32x32xf32, #tpu.memory_space<vmem>>, vector<1x32x32xf32>
    %68 = vector.shape_cast %67 : vector<1x32x32xf32> to vector<32x32xf32>
    %cst_54 = arith.constant dense<0.000000e+00> : vector<8x32xf32>
    %69 = tpu.matmul %66, %68, %cst_54 {dimension_numbers = #tpu.dot_dimension_numbers<[1], [0], [0], [1], [0, 0, 1, 1], [], []>} : vector<8x32xf32>, vector<32x32xf32>, vector<8x32xf32> -> vector<8x32xf32>
    %c7_55 = arith.constant 7 : index
    %c0_56 = arith.constant 0 : index
    %c0_57 = arith.constant 0 : index
    %70 = vector.load %arg5[%c7_55, %c0_56, %c0_57] : memref<8x1x32xf32, #tpu.memory_space<vmem>>, vector<1x1x32xf32>
    %71 = vector.shape_cast %70 : vector<1x1x32xf32> to vector<1x32xf32>
    %72 = vector.broadcast %71 : vector<1x32xf32> to vector<8x32xf32>
    %73 = arith.addf %69, %72 : vector<8x32xf32>
    %74 = math.tanh %73 : vector<8x32xf32>
    %c0_58 = arith.constant 0 : index
    %c0_59 = arith.constant 0 : index
    %75 = vector.load %arg6[%c0_58, %c0_59] : memref<32x128xf32, #tpu.memory_space<vmem>>, vector<32x128xf32>
    %cst_60 = arith.constant dense<0.000000e+00> : vector<8x128xf32>
    %76 = tpu.matmul %74, %75, %cst_60 {dimension_numbers = #tpu.dot_dimension_numbers<[1], [0], [0], [1], [0, 0, 1, 1], [], []>} : vector<8x32xf32>, vector<32x128xf32>, vector<8x128xf32> -> vector<8x128xf32>
    %c0_61 = arith.constant 0 : index
    %c0_62 = arith.constant 0 : index
    %77 = vector.load %arg7[%c0_61, %c0_62] : memref<1x128xf32, #tpu.memory_space<vmem>>, vector<1x128xf32>
    %78 = vector.broadcast %77 : vector<1x128xf32> to vector<8x128xf32>
    %79 = arith.addf %76, %78 : vector<8x128xf32>
    %c0_63 = arith.constant 0 : index
    %c0_64 = arith.constant 0 : index
    %80 = vector.load %arg8[%c0_63, %c0_64] : memref<8x128xf32, #tpu.memory_space<vmem>>, vector<8x128xf32>
    tpu.vector_store %arg8[%c0_63, %c0_64], %79 {strides = array<i32>} : memref<8x128xf32, #tpu.memory_space<vmem>>, vector<8x128xf32>,
    return
  }
  func.func @transform_0(%arg0: i32) -> (i32, i32) {
    %c0_i32 = arith.constant 0 : i32
    %c0_i32_0 = arith.constant 0 : i32
    return %arg0, %c0_i32 : i32, i32
  }
  func.func @transform_1(%arg0: i32) -> (i32, i32) {
    %c0_i32 = arith.constant 0 : i32
    %c0_i32_0 = arith.constant 0 : i32
    %c0_i32_1 = arith.constant 0 : i32
    return %c0_i32, %c0_i32_0 : i32, i32
  }
  func.func @transform_2(%arg0: i32) -> (i32, i32) {
    %c0_i32 = arith.constant 0 : i32
    %c0_i32_0 = arith.constant 0 : i32
    %c0_i32_1 = arith.constant 0 : i32
    return %c0_i32, %c0_i32_0 : i32, i32
  }
  func.func @transform_3(%arg0: i32) -> (i32, i32, i32) {
    %c0_i32 = arith.constant 0 : i32
    %c0_i32_0 = arith.constant 0 : i32
    %c0_i32_1 = arith.constant 0 : i32
    %c0_i32_2 = arith.constant 0 : i32
    return %c0_i32, %c0_i32_0, %c0_i32_1 : i32, i32, i32
  }
  func.func @transform_4(%arg0: i32) -> (i32, i32, i32) {
    %c0_i32 = arith.constant 0 : i32
    %c0_i32_0 = arith.constant 0 : i32
    %c0_i32_1 = arith.constant 0 : i32
    %c0_i32_2 = arith.constant 0 : i32
    return %c0_i32, %c0_i32_0, %c0_i32_1 : i32, i32, i32
  }
  func.func @transform_5(%arg0: i32) -> (i32, i32) {
    %c0_i32 = arith.constant 0 : i32
    %c0_i32_0 = arith.constant 0 : i32
    %c0_i32_1 = arith.constant 0 : i32
    return %c0_i32, %c0_i32_0 : i32, i32
  }
  func.func @transform_6(%arg0: i32) -> (i32, i32) {
    %c0_i32 = arith.constant 0 : i32
    %c0_i32_0 = arith.constant 0 : i32
    %c0_i32_1 = arith.constant 0 : i32
    return %c0_i32, %c0_i32_0 : i32, i32
  }
  func.func @transform_7(%arg0: i32) -> (i32, i32) {
    %c0_i32 = arith.constant 0 : i32
    %c0_i32_0 = arith.constant 0 : i32
    return %arg0, %c0_i32 : i32, i32
  }
}

</mosaic_0001>

<llo_original>
// kernel: tpu_custom_call.1
$region0: #{tpu_custom_call.1}
  #allocation0 [shape = 'u32[]', space=smem, size = 0x4, offset = 0x4, fixed_abs, tag = 'smem constant byte address 0x4 - core index']
  #allocation1 [shape = 'u32[144,128]{1,0:T(1,128)}', space=vmem, size = 0x12000, scoped, tag = 'internal scratch']
  %s0 = inlined_call_operand.hbm [shape: f32[8,16], index: 0, kind: input, shape index: {}]
  %s1 = inlined_call_operand.hbm [shape: f32[16,32], index: 1, kind: input, shape index: {}]
  %s2 = inlined_call_operand.vmem [shape: f32[1,32], index: 2, kind: input, shape index: {}]
  %s3 = inlined_call_operand.hbm [shape: f32[8,32,32], index: 3, kind: input, shape index: {}]
  %s4 = inlined_call_operand.hbm [shape: f32[8,1,32], index: 4, kind: input, shape index: {}]
  %s5 = inlined_call_operand.hbm [shape: f32[32,128], index: 5, kind: input, shape index: {}]
  %s6 = inlined_call_operand.vmem [shape: f32[1,128], index: 6, kind: input, shape index: {}]
  %s7 = inlined_call_operand.hbm [shape: f32[8,128], index: 7, kind: output, shape index: {}]
  %s8 = sld [smem:[#allocation0]]
  $region58: #{tpu_custom_call.1} parent=0
    _
  %s10 = ssub.s32 1, %s8
  %s11 = scalar_select 0, %s10, %s8
  $region1: #{tpu_custom_call.1} parent=0
    #allocation2 [shape = 'u8[4096]{0}', space=vmem, size = 0x1000, scoped, tag = 'input window, operand 0, single buffered']
    #allocation3 [shape = 's32[1]{0}', space=sflag, size = 0x4, scoped, tag = 'scoped memory for tpu_custom_call.1']
    #allocation4 [shape = 's32[1]{0}', space=sflag, size = 0x4, scoped, tag = 'scoped memory for tpu_custom_call.1']
    #allocation5 [shape = 'u8[8192]{0}', space=vmem, size = 0x2000, scoped, tag = 'input window, operand 1, single buffered']
    #allocation6 [shape = 's32[1]{0}', space=sflag, size = 0x4, scoped, tag = 'scoped memory for tpu_custom_call.1']
    #allocation7 [shape = 'u8[131072]{0}', space=vmem, size = 0x20000, scoped, tag = 'input window, operand 3, single buffered']
    #allocation8 [shape = 'u8[4096]{0}', space=vmem, size = 0x1000, scoped, tag = 'input window, operand 4, single buffered']
    #allocation9 [shape = 's32[1]{0}', space=sflag, size = 0x4, scoped, tag = 'scoped memory for tpu_custom_call.1']
    #allocation10 [shape = 'u8[16384]{0}', space=vmem, size = 0x4000, scoped, tag = 'input window, operand 5, single buffered']
    #allocation11 [shape = 'u8[4096]{0}', space=vmem, size = 0x1000, scoped, tag = 'output window, operand 0, single buffered']
    %12 = vsyncpa [#allocation3], 0
    %13 = vsyncpa [#allocation6], 0
    %14 = vsyncpa [#allocation9], 0
    %15 = vsyncpa [#allocation4], 0
    // Predicated region
    $region2: #{tpu_custom_call.1} parent=1 // pred_check
      _
    $region3: #{tpu_custom_call.1} parent=1 // pred_check_branch
      %17 = sbr.rel (0) target = $region5
    $region4: #{tpu_custom_call.1} parent=1 // pred_region
      %s19 = ssub.s32 128, 128
      %20 = vsyncadd [#allocation3], %s19
      %s22 = sshll.u32 [#allocation2], 4
      %s23 = int_to_ptr.vmem [resolvable:$true] %s22
      %25 = dma.hbm_to_vmem [thread:$0]  %s0, 128, %s23, [#allocation3]
    $region5: #{tpu_custom_call.1} parent=1 // pred_fallthru
      _
    // Predicated region
    $region6: #{tpu_custom_call.1} parent=1 // pred_check
      _
    $region7: #{tpu_custom_call.1} parent=1 // pred_check_branch
      %27 = sbr.rel (0) target = $region9
    $region8: #{tpu_custom_call.1} parent=1 // pred_region
      %s29 = ssub.s32 256, 256
      %30 = vsyncadd [#allocation6], %s29
      %s31 = sshll.u32 [#allocation5], 4
      %s32 = int_to_ptr.vmem [resolvable:$true] %s31
      %37 = dma.hbm_to_vmem [thread:$0]  %s1, 256, %s32, [#allocation6], 128, 128, 8
    $region9: #{tpu_custom_call.1} parent=1 // pred_fallthru
      _
    // Predicated region
    $region10: #{tpu_custom_call.1} parent=1 // pred_check
      _
    $region11: #{tpu_custom_call.1} parent=1 // pred_check_branch
      %39 = sbr.rel (0) target = $region13
    $region12: #{tpu_custom_call.1} parent=1 // pred_region
      _
    $region13: #{tpu_custom_call.1} parent=1 // pred_fallthru
      _
    // Predicated region
    $region14: #{tpu_custom_call.1} parent=1 // pred_check
      _
    $region15: #{tpu_custom_call.1} parent=1 // pred_check_branch
      %41 = sbr.rel (0) target = $region17
    $region16: #{tpu_custom_call.1} parent=1 // pred_region
      %s43 = ssub.s32 4096, 4096
      %44 = vsyncadd [#allocation6], %s43
      %s45 = sshll.u32 [#allocation7], 4
      %s46 = int_to_ptr.vmem [resolvable:$true] %s45
      %51 = dma.hbm_to_vmem [thread:$0]  %s3, 4096, %s46, [#allocation6], 128, 128, 8
    $region17: #{tpu_custom_call.1} parent=1 // pred_fallthru
      _
    // Predicated region
    $region18: #{tpu_custom_call.1} parent=1 // pred_check
      _
    $region19: #{tpu_custom_call.1} parent=1 // pred_check_branch
      %53 = sbr.rel (0) target = $region21
    $region20: #{tpu_custom_call.1} parent=1 // pred_region
      %s55 = ssub.s32 128, 128
      %56 = vsyncadd [#allocation9], %s55
      %s57 = sshll.u32 [#allocation8], 4
      %s58 = int_to_ptr.vmem [resolvable:$true] %s57
      %63 = dma.hbm_to_vmem [thread:$0]  %s4, 128, %s58, [#allocation9], 16, 16, 1
    $region21: #{tpu_custom_call.1} parent=1 // pred_fallthru
      _
    // Predicated region
    $region22: #{tpu_custom_call.1} parent=1 // pred_check
      _
    $region23: #{tpu_custom_call.1} parent=1 // pred_check_branch
      %65 = sbr.rel (0) target = $region25
    $region24: #{tpu_custom_call.1} parent=1 // pred_region
      %s67 = ssub.s32 512, 512
      %68 = vsyncadd [#allocation9], %s67
      %s69 = sshll.u32 [#allocation10], 4
      %s70 = int_to_ptr.vmem [resolvable:$true] %s69
      %75 = dma.hbm_to_vmem [thread:$0]  %s5, 512, %s70, [#allocation9], 128, 128, 8
    $region25: #{tpu_custom_call.1} parent=1 // pred_fallthru
      _
    // Predicated region
    $region26: #{tpu_custom_call.1} parent=1 // pred_check
      _
    $region27: #{tpu_custom_call.1} parent=1 // pred_check_branch
      %77 = sbr.rel (0) target = $region29
    $region28: #{tpu_custom_call.1} parent=1 // pred_region
      _
    $region29: #{tpu_custom_call.1} parent=1 // pred_fallthru
      _
    // Predicated region
    $region30: #{tpu_custom_call.1} parent=1 // pred_check
      _
    $region31: #{tpu_custom_call.1} parent=1 // pred_check_branch
      %79 = sbr.rel (0) target = $region33
    $region32: #{tpu_custom_call.1} parent=1 // pred_region
      %80 = dma.done [#allocation3], 128
    $region33: #{tpu_custom_call.1} parent=1 // pred_fallthru
      _
    // Predicated region
    $region34: #{tpu_custom_call.1} parent=1 // pred_check
      _
    $region35: #{tpu_custom_call.1} parent=1 // pred_check_branch
      %82 = sbr.rel (0) target = $region37
    $region36: #{tpu_custom_call.1} parent=1 // pred_region
      %83 = dma.done [#allocation6], 256
    $region37: #{tpu_custom_call.1} parent=1 // pred_fallthru
      _
    // Predicated region
    $region38: #{tpu_custom_call.1} parent=1 // pred_check
      _
    $region39: #{tpu_custom_call.1} parent=1 // pred_check_branch
      %85 = sbr.rel (0) target = $region41
    $region40: #{tpu_custom_call.1} parent=1 // pred_region
      %86 = dma.done [#allocation6], 4096
    $region41: #{tpu_custom_call.1} parent=1 // pred_fallthru
      _
    // Predicated region
    $region42: #{tpu_custom_call.1} parent=1 // pred_check
      _
    $region43: #{tpu_custom_call.1} parent=1 // pred_check_branch
      %88 = sbr.rel (0) target = $region45
    $region44: #{tpu_custom_call.1} parent=1 // pred_region
      %89 = dma.done [#allocation9], 128
    $region45: #{tpu_custom_call.1} parent=1 // pred_fallthru
      _
    // Predicated region
    $region46: #{tpu_custom_call.1} parent=1 // pred_check
      _
    $region47: #{tpu_custom_call.1} parent=1 // pred_check_branch
      %91 = sbr.rel (0) target = $region49
    $region48: #{tpu_custom_call.1} parent=1 // pred_region
      %92 = dma.done [#allocation9], 512
    $region49: #{tpu_custom_call.1} parent=1 // pred_fallthru
      _
    %v93 = vld [vmem:[#allocation2] sm:$0xff]
    %v94 = vld [vmem:[#allocation5] sm:$0xff]
    %v95 = vld [vmem:[#allocation5 + $0x8] sm:$0xff]
    %v96 = vld [vmem:[%s2] sm:$0x1]
    %v98 = vlaneseq
    %v99 = vshrl.u32 %v98, 7
    %v100 = vsub.s32 0, %v99
    %v101 = vrot.slane %v96, %v100
    %vm103 = vcmask 130048
    %v105 = vsel %vm103, %v93, 0
    %107 = vmatprep.subr.mxu0 0.0
    %108 = vmatpush1.msra.mxu0 0.0
    %109 = vmatprep.subr.mxu0 0.0
    %110 = vmatpush1.msra.mxu0 0.0
    %111 = vmatprep.subr.mxu0 0.0
    %112 = vmatpush1.msra.mxu0 0.0
    %113 = vmatprep.subr.mxu0 0.0
    %114 = vmatpush1.msra.mxu0 0.0
    %115 = vmatprep.subr.mxu0 0.0
    %116 = vmatpush1.msra.mxu0 0.0
    %117 = vmatprep.subr.mxu0 0.0
    %118 = vmatpush1.msra.mxu0 0.0
    %119 = vmatprep.subr.mxu0 0.0
    %120 = vmatpush1.msra.mxu0 0.0
    %121 = vmatprep.subr.mxu0 0.0
    %122 = vmatpush1.msra.mxu0 0.0
    %123 = vmatprep.subr.mxu0 0.0
    %124 = vmatpush1.msra.mxu0 0.0
    %125 = vmatprep.subr.mxu0 0.0
    %126 = vmatpush1.msra.mxu0 0.0
    %127 = vmatprep.subr.mxu0 0.0
    %128 = vmatpush1.msra.mxu0 0.0
    %129 = vmatprep.subr.mxu0 0.0
    %130 = vmatpush1.msra.mxu0 0.0
    %131 = vmatprep.subr.mxu0 0.0
    %132 = vmatpush1.msra.mxu0 0.0
    %133 = vmatprep.subr.mxu0 0.0
    %134 = vmatpush1.msra.mxu0 0.0
    %135 = vmatprep.subr.mxu0 0.0
    %136 = vmatpush1.msra.mxu0 %v95
    %137 = vmatprep.subr.mxu0 0.0
    %138 = vmatpush1.msra.mxu0 %v94
    %139 = vmatprep.subr.mxu0 0.0
    %140 = vmatpush2.msra.mxu0 0.0
    %141 = vmatprep.subr.mxu0 0.0
    %142 = vmatpush2.msra.mxu0 0.0
    %143 = vmatprep.subr.mxu0 0.0
    %144 = vmatpush2.msra.mxu0 0.0
    %145 = vmatprep.subr.mxu0 0.0
    %146 = vmatpush2.msra.mxu0 0.0
    %147 = vmatprep.subr.mxu0 0.0
    %148 = vmatpush2.msra.mxu0 0.0
    %149 = vmatprep.subr.mxu0 0.0
    %150 = vmatpush2.msra.mxu0 0.0
    %151 = vmatprep.subr.mxu0 0.0
    %152 = vmatpush2.msra.mxu0 0.0
    %153 = vmatprep.subr.mxu0 0.0
    %154 = vmatpush2.msra.mxu0 0.0
    %155 = vmatprep.subr.mxu0 0.0
    %156 = vmatpush2.msra.mxu0 0.0
    %157 = vmatprep.subr.mxu0 0.0
    %158 = vmatpush2.msra.mxu0 0.0
    %159 = vmatprep.subr.mxu0 0.0
    %160 = vmatpush2.msra.mxu0 0.0
    %161 = vmatprep.subr.mxu0 0.0
    %162 = vmatpush2.msra.mxu0 0.0
    %163 = vmatprep.subr.mxu0 0.0
    %164 = vmatpush2.msra.mxu0 0.0
    %165 = vmatprep.subr.mxu0 0.0
    %166 = vmatpush2.msra.mxu0 0.0
    %167 = vmatprep.subr.mxu0 0.0
    %168 = vmatpush2.msra.mxu0 0.0
    %169 = vmatprep.subr.mxu0 0.0
    %170 = vmatpush2.msra.mxu0 0.0
    %171 = vmatprep.mubr.f32.mxu0 0.0
    %172 = vmatmul.mubr.f32.gmra.mxu0 %v105
    %v173 = vpop.f32.mrf.mxu0
    %v174 = vadd.f32 %v101, %v173
    %v175 = vpop.f32.mrf.mxu0
    %176 = vdwg.mxu0
    %v177 = vtanh.pop %v174
    %v178 = vld [vmem:[#allocation7] sm:$0xff]
    %v179 = vld [vmem:[#allocation7 + $0x8] sm:$0xff]
    %v180 = vld [vmem:[#allocation7 + $0x10] sm:$0xff]
    %v181 = vld [vmem:[#allocation7 + $0x18] sm:$0xff]
    %v182 = vld [vmem:[#allocation8] sm:$0x1]
    %v184 = vlaneseq
    %v185 = vshrl.u32 %v184, 7
    %v186 = vsub.s32 0, %v185
    %v187 = vrot.slane %v182, %v186
    %vm189 = vcmask 261120
    %v191 = vsel %vm189, %v177, 0
    %193 = vmatprep.subr.mxu0 0.0
    %194 = vmatpush1.msra.mxu0 0.0
    %195 = vmatprep.subr.mxu0 0.0
    %196 = vmatpush1.msra.mxu0 0.0
    %197 = vmatprep.subr.mxu0 0.0
    %198 = vmatpush1.msra.mxu0 0.0
    %199 = vmatprep.subr.mxu0 0.0
    %200 = vmatpush1.msra.mxu0 0.0
    %201 = vmatprep.subr.mxu0 0.0
    %202 = vmatpush1.msra.mxu0 0.0
    %203 = vmatprep.subr.mxu0 0.0
    %204 = vmatpush1.msra.mxu0 0.0
    %205 = vmatprep.subr.mxu0 0.0
    %206 = vmatpush1.msra.mxu0 0.0
    %207 = vmatprep.subr.mxu0 0.0
    %208 = vmatpush1.msra.mxu0 0.0
    %209 = vmatprep.subr.mxu0 0.0
    %210 = vmatpush1.msra.mxu0 0.0
    %211 = vmatprep.subr.mxu0 0.0
    %212 = vmatpush1.msra.mxu0 0.0
    %213 = vmatprep.subr.mxu0 0.0
    %214 = vmatpush1.msra.mxu0 0.0
    %215 = vmatprep.subr.mxu0 0.0
    %216 = vmatpush1.msra.mxu0 0.0
    %217 = vmatprep.subr.mxu0 0.0
    %218 = vmatpush1.msra.mxu0 %v181
    %219 = vmatprep.subr.mxu0 0.0
    %220 = vmatpush1.msra.mxu0 %v180
    %221 = vmatprep.subr.mxu0 0.0
    %222 = vmatpush1.msra.mxu0 %v179
    %223 = vmatprep.subr.mxu0 0.0
    %224 = vmatpush1.msra.mxu0 %v178
    %225 = vmatprep.subr.mxu0 0.0
    %226 = vmatpush2.msra.mxu0 0.0
    %227 = vmatprep.subr.mxu0 0.0
    %228 = vmatpush2.msra.mxu0 0.0
    %229 = vmatprep.subr.mxu0 0.0
    %230 = vmatpush2.msra.mxu0 0.0
    %231 = vmatprep.subr.mxu0 0.0
    %232 = vmatpush2.msra.mxu0 0.0
    %233 = vmatprep.subr.mxu0 0.0
    %234 = vmatpush2.msra.mxu0 0.0
    %235 = vmatprep.subr.mxu0 0.0
    %236 = vmatpush2.msra.mxu0 0.0
    %237 = vmatprep.subr.mxu0 0.0
    %238 = vmatpush2.msra.mxu0 0.0
    %239 = vmatprep.subr.mxu0 0.0
    %240 = vmatpush2.msra.mxu0 0.0
    %241 = vmatprep.subr.mxu0 0.0
    %242 = vmatpush2.msra.mxu0 0.0
    %243 = vmatprep.subr.mxu0 0.0
    %244 = vmatpush2.msra.mxu0 0.0
    %245 = vmatprep.subr.mxu0 0.0
    %246 = vmatpush2.msra.mxu0 0.0
    %247 = vmatprep.subr.mxu0 0.0
    %248 = vmatpush2.msra.mxu0 0.0
    %249 = vmatprep.subr.mxu0 0.0
    %250 = vmatpush2.msra.mxu0 0.0
    %251 = vmatprep.subr.mxu0 0.0
    %252 = vmatpush2.msra.mxu0 0.0
    %253 = vmatprep.subr.mxu0 0.0
    %254 = vmatpush2.msra.mxu0 0.0
    %255 = vmatprep.subr.mxu0 0.0
    %256 = vmatpush2.msra.mxu0 0.0
    %257 = vmatprep.mubr.f32.mxu0 0.0
    %258 = vmatmul.mubr.f32.gmra.mxu0 %v191
    %v259 = vpop.f32.mrf.mxu0
    %v260 = vadd.f32 %v187, %v259
    %v261 = vpop.f32.mrf.mxu0
    %262 = vdwg.mxu0
    %v263 = vmax.f32 %v260, 0.0
    %s264 = scalar_lea.vmem [#allocation7], 32
    %v265 = vld [vmem:[%s264] sm:$0xff]
    %v266 = vld [vmem:[%s264 + $0x8] sm:$0xff]
    %v267 = vld [vmem:[%s264 + $0x10] sm:$0xff]
    %v268 = vld [vmem:[%s264 + $0x18] sm:$0xff]
    %s269 = scalar_lea.vmem [#allocation8], 1
    %v270 = vld [vmem:[%s269] sm:$0x1]
    %v272 = vlaneseq
    %v273 = vshrl.u32 %v272, 7
    %v274 = vsub.s32 0, %v273
    %v275 = vrot.slane %v270, %v274
    %v278 = vsel %vm189, %v263, 0
    %280 = vmatprep.subr.mxu0 0.0
    %281 = vmatpush1.msra.mxu0 0.0
    %282 = vmatprep.subr.mxu0 0.0
    %283 = vmatpush1.msra.mxu0 0.0
    %284 = vmatprep.subr.mxu0 0.0
    %285 = vmatpush1.msra.mxu0 0.0
    %286 = vmatprep.subr.mxu0 0.0
    %287 = vmatpush1.msra.mxu0 0.0
    %288 = vmatprep.subr.mxu0 0.0
    %289 = vmatpush1.msra.mxu0 0.0
    %290 = vmatprep.subr.mxu0 0.0
    %291 = vmatpush1.msra.mxu0 0.0
    %292 = vmatprep.subr.mxu0 0.0
    %293 = vmatpush1.msra.mxu0 0.0
    %294 = vmatprep.subr.mxu0 0.0
    %295 = vmatpush1.msra.mxu0 0.0
    %296 = vmatprep.subr.mxu0 0.0
    %297 = vmatpush1.msra.mxu0 0.0
    %298 = vmatprep.subr.mxu0 0.0
    %299 = vmatpush1.msra.mxu0 0.0
    %300 = vmatprep.subr.mxu0 0.0
    %301 = vmatpush1.msra.mxu0 0.0
    %302 = vmatprep.subr.mxu0 0.0
    %303 = vmatpush1.msra.mxu0 0.0
    %304 = vmatprep.subr.mxu0 0.0
    %305 = vmatpush1.msra.mxu0 %v268
    %306 = vmatprep.subr.mxu0 0.0
    %307 = vmatpush1.msra.mxu0 %v267
    %308 = vmatprep.subr.mxu0 0.0
    %309 = vmatpush1.msra.mxu0 %v266
    %310 = vmatprep.subr.mxu0 0.0
    %311 = vmatpush1.msra.mxu0 %v265
    %312 = vmatprep.subr.mxu0 0.0
    %313 = vmatpush2.msra.mxu0 0.0
    %314 = vmatprep.subr.mxu0 0.0
    %315 = vmatpush2.msra.mxu0 0.0
    %316 = vmatprep.subr.mxu0 0.0
    %317 = vmatpush2.msra.mxu0 0.0
    %318 = vmatprep.subr.mxu0 0.0
    %319 = vmatpush2.msra.mxu0 0.0
    %320 = vmatprep.subr.mxu0 0.0
    %321 = vmatpush2.msra.mxu0 0.0
    %322 = vmatprep.subr.mxu0 0.0
    %323 = vmatpush2.msra.mxu0 0.0
    %324 = vmatprep.subr.mxu0 0.0
    %325 = vmatpush2.msra.mxu0 0.0
    %326 = vmatprep.subr.mxu0 0.0
    %327 = vmatpush2.msra.mxu0 0.0
    %328 = vmatprep.subr.mxu0 0.0
    %329 = vmatpush2.msra.mxu0 0.0
    %330 = vmatprep.subr.mxu0 0.0
    %331 = vmatpush2.msra.mxu0 0.0
    %332 = vmatprep.subr.mxu0 0.0
    %333 = vmatpush2.msra.mxu0 0.0
    %334 = vmatprep.subr.mxu0 0.0
    %335 = vmatpush2.msra.mxu0 0.0
    %336 = vmatprep.subr.mxu0 0.0
    %337 = vmatpush2.msra.mxu0 0.0
    %338 = vmatprep.subr.mxu0 0.0
    %339 = vmatpush2.msra.mxu0 0.0
    %340 = vmatprep.subr.mxu0 0.0
    %341 = vmatpush2.msra.mxu0 0.0
    %342 = vmatprep.subr.mxu0 0.0
    %343 = vmatpush2.msra.mxu0 0.0
    %344 = vmatprep.mubr.f32.mxu0 0.0
    %345 = vmatmul.mubr.f32.gmra.mxu0 %v278
    %v346 = vpop.f32.mrf.mxu0
    %v347 = vadd.f32 %v275, %v346
    %v348 = vpop.f32.mrf.mxu0
    %349 = vdwg.mxu0
    %v350 = vmax.f32 %v347, 0.0
    %s351 = scalar_lea.vmem [#allocation7], 64
    %v352 = vld [vmem:[%s351] sm:$0xff]
    %v353 = vld [vmem:[%s351 + $0x8] sm:$0xff]
    %v354 = vld [vmem:[%s351 + $0x10] sm:$0xff]
    %v355 = vld [vmem:[%s351 + $0x18] sm:$0xff]
    %s356 = scalar_lea.vmem [#allocation8], 2
    %v357 = vld [vmem:[%s356] sm:$0x1]
    %v359 = vlaneseq
    %v360 = vshrl.u32 %v359, 7
    %v361 = vsub.s32 0, %v360
    %v362 = vrot.slane %v357, %v361
    %v365 = vsel %vm189, %v350, 0
    %367 = vmatprep.subr.mxu0 0.0
    %368 = vmatpush1.msra.mxu0 0.0
    %369 = vmatprep.subr.mxu0 0.0
    %370 = vmatpush1.msra.mxu0 0.0
    %371 = vmatprep.subr.mxu0 0.0
    %372 = vmatpush1.msra.mxu0 0.0
    %373 = vmatprep.subr.mxu0 0.0
    %374 = vmatpush1.msra.mxu0 0.0
    %375 = vmatprep.subr.mxu0 0.0
    %376 = vmatpush1.msra.mxu0 0.0
    %377 = vmatprep.subr.mxu0 0.0
    %378 = vmatpush1.msra.mxu0 0.0
    %379 = vmatprep.subr.mxu0 0.0
    %380 = vmatpush1.msra.mxu0 0.0
    %381 = vmatprep.subr.mxu0 0.0
    %382 = vmatpush1.msra.mxu0 0.0
    %383 = vmatprep.subr.mxu0 0.0
    %384 = vmatpush1.msra.mxu0 0.0
    %385 = vmatprep.subr.mxu0 0.0
    %386 = vmatpush1.msra.mxu0 0.0
    %387 = vmatprep.subr.mxu0 0.0
    %388 = vmatpush1.msra.mxu0 0.0
    %389 = vmatprep.subr.mxu0 0.0
    %390 = vmatpush1.msra.mxu0 0.0
    %391 = vmatprep.subr.mxu0 0.0
    %392 = vmatpush1.msra.mxu0 %v355
    %393 = vmatprep.subr.mxu0 0.0
    %394 = vmatpush1.msra.mxu0 %v354
    %395 = vmatprep.subr.mxu0 0.0
    %396 = vmatpush1.msra.mxu0 %v353
    %397 = vmatprep.subr.mxu0 0.0
    %398 = vmatpush1.msra.mxu0 %v352
    %399 = vmatprep.subr.mxu0 0.0
    %400 = vmatpush2.msra.mxu0 0.0
    %401 = vmatprep.subr.mxu0 0.0
    %402 = vmatpush2.msra.mxu0 0.0
    %403 = vmatprep.subr.mxu0 0.0
    %404 = vmatpush2.msra.mxu0 0.0
    %405 = vmatprep.subr.mxu0 0.0
    %406 = vmatpush2.msra.mxu0 0.0
    %407 = vmatprep.subr.mxu0 0.0
    %408 = vmatpush2.msra.mxu0 0.0
    %409 = vmatprep.subr.mxu0 0.0
    %410 = vmatpush2.msra.mxu0 0.0
    %411 = vmatprep.subr.mxu0 0.0
    %412 = vmatpush2.msra.mxu0 0.0
    %413 = vmatprep.subr.mxu0 0.0
    %414 = vmatpush2.msra.mxu0 0.0
    %415 = vmatprep.subr.mxu0 0.0
    %416 = vmatpush2.msra.mxu0 0.0
    %417 = vmatprep.subr.mxu0 0.0
    %418 = vmatpush2.msra.mxu0 0.0
    %419 = vmatprep.subr.mxu0 0.0
    %420 = vmatpush2.msra.mxu0 0.0
    %421 = vmatprep.subr.mxu0 0.0
    %422 = vmatpush2.msra.mxu0 0.0
    %423 = vmatprep.subr.mxu0 0.0
    %424 = vmatpush2.msra.mxu0 0.0
    %425 = vmatprep.subr.mxu0 0.0
    %426 = vmatpush2.msra.mxu0 0.0
    %427 = vmatprep.subr.mxu0 0.0
    %428 = vmatpush2.msra.mxu0 0.0
    %429 = vmatprep.subr.mxu0 0.0
    %430 = vmatpush2.msra.mxu0 0.0
    %431 = vmatprep.mubr.f32.mxu0 0.0
    %432 = vmatmul.mubr.f32.gmra.mxu0 %v365
    %v433 = vpop.f32.mrf.mxu0
    %v434 = vadd.f32 %v362, %v433
    %v435 = vpop.f32.mrf.mxu0
    %436 = vdwg.mxu0
    %v437 = vmax.f32 %v434, 0.0
    %s438 = scalar_lea.vmem [#allocation7], 96
    %v439 = vld [vmem:[%s438] sm:$0xff]
    %v440 = vld [vmem:[%s438 + $0x8] sm:$0xff]
    %v441 = vld [vmem:[%s438 + $0x10] sm:$0xff]
    %v442 = vld [vmem:[%s438 + $0x18] sm:$0xff]
    %s443 = scalar_lea.vmem [#allocation8], 3
    %v444 = vld [vmem:[%s443] sm:$0x1]
    %v446 = vlaneseq
    %v447 = vshrl.u32 %v446, 7
    %v448 = vsub.s32 0, %v447
    %v449 = vrot.slane %v444, %v448
    %v452 = vsel %vm189, %v437, 0
    %454 = vmatprep.subr.mxu0 0.0
    %455 = vmatpush1.msra.mxu0 0.0
    %456 = vmatprep.subr.mxu0 0.0
    %457 = vmatpush1.msra.mxu0 0.0
    %458 = vmatprep.subr.mxu0 0.0
    %459 = vmatpush1.msra.mxu0 0.0
    %460 = vmatprep.subr.mxu0 0.0
    %461 = vmatpush1.msra.mxu0 0.0
    %462 = vmatprep.subr.mxu0 0.0
    %463 = vmatpush1.msra.mxu0 0.0
    %464 = vmatprep.subr.mxu0 0.0
    %465 = vmatpush1.msra.mxu0 0.0
    %466 = vmatprep.subr.mxu0 0.0
    %467 = vmatpush1.msra.mxu0 0.0
    %468 = vmatprep.subr.mxu0 0.0
    %469 = vmatpush1.msra.mxu0 0.0
    %470 = vmatprep.subr.mxu0 0.0
    %471 = vmatpush1.msra.mxu0 0.0
    %472 = vmatprep.subr.mxu0 0.0
    %473 = vmatpush1.msra.mxu0 0.0
    %474 = vmatprep.subr.mxu0 0.0
    %475 = vmatpush1.msra.mxu0 0.0
    %476 = vmatprep.subr.mxu0 0.0
    %477 = vmatpush1.msra.mxu0 0.0
    %478 = vmatprep.subr.mxu0 0.0
    %479 = vmatpush1.msra.mxu0 %v442
    %480 = vmatprep.subr.mxu0 0.0
    %481 = vmatpush1.msra.mxu0 %v441
    %482 = vmatprep.subr.mxu0 0.0
    %483 = vmatpush1.msra.mxu0 %v440
    %484 = vmatprep.subr.mxu0 0.0
    %485 = vmatpush1.msra.mxu0 %v439
    %486 = vmatprep.subr.mxu0 0.0
    %487 = vmatpush2.msra.mxu0 0.0
    %488 = vmatprep.subr.mxu0 0.0
    %489 = vmatpush2.msra.mxu0 0.0
    %490 = vmatprep.subr.mxu0 0.0
    %491 = vmatpush2.msra.mxu0 0.0
    %492 = vmatprep.subr.mxu0 0.0
    %493 = vmatpush2.msra.mxu0 0.0
    %494 = vmatprep.subr.mxu0 0.0
    %495 = vmatpush2.msra.mxu0 0.0
    %496 = vmatprep.subr.mxu0 0.0
    %497 = vmatpush2.msra.mxu0 0.0
    %498 = vmatprep.subr.mxu0 0.0
    %499 = vmatpush2.msra.mxu0 0.0
    %500 = vmatprep.subr.mxu0 0.0
    %501 = vmatpush2.msra.mxu0 0.0
    %502 = vmatprep.subr.mxu0 0.0
    %503 = vmatpush2.msra.mxu0 0.0
    %504 = vmatprep.subr.mxu0 0.0
    %505 = vmatpush2.msra.mxu0 0.0
    %506 = vmatprep.subr.mxu0 0.0
    %507 = vmatpush2.msra.mxu0 0.0
    %508 = vmatprep.subr.mxu0 0.0
    %509 = vmatpush2.msra.mxu0 0.0
    %510 = vmatprep.subr.mxu0 0.0
    %511 = vmatpush2.msra.mxu0 0.0
    %512 = vmatprep.subr.mxu0 0.0
    %513 = vmatpush2.msra.mxu0 0.0
    %514 = vmatprep.subr.mxu0 0.0
    %515 = vmatpush2.msra.mxu0 0.0
    %516 = vmatprep.subr.mxu0 0.0
    %517 = vmatpush2.msra.mxu0 0.0
    %518 = vmatprep.mubr.f32.mxu0 0.0
    %519 = vmatmul.mubr.f32.gmra.mxu0 %v452
    %v520 = vpop.f32.mrf.mxu0
    %v521 = vadd.f32 %v449, %v520
    %v522 = vpop.f32.mrf.mxu0
    %523 = vdwg.mxu0
    %v524 = vmax.f32 %v521, 0.0
    %s525 = scalar_lea.vmem [#allocation7], 128
    %v526 = vld [vmem:[%s525] sm:$0xff]
    %v527 = vld [vmem:[%s525 + $0x8] sm:$0xff]
    %v528 = vld [vmem:[%s525 + $0x10] sm:$0xff]
    %v529 = vld [vmem:[%s525 + $0x18] sm:$0xff]
    %s530 = scalar_lea.vmem [#allocation8], 4
    %v531 = vld [vmem:[%s530] sm:$0x1]
    %v533 = vlaneseq
    %v534 = vshrl.u32 %v533, 7
    %v535 = vsub.s32 0, %v534
    %v536 = vrot.slane %v531, %v535
    %v539 = vsel %vm189, %v524, 0
    %541 = vmatprep.subr.mxu0 0.0
    %542 = vmatpush1.msra.mxu0 0.0
    %543 = vmatprep.subr.mxu0 0.0
    %544 = vmatpush1.msra.mxu0 0.0
    %545 = vmatprep.subr.mxu0 0.0
    %546 = vmatpush1.msra.mxu0 0.0
    %547 = vmatprep.subr.mxu0 0.0
    %548 = vmatpush1.msra.mxu0 0.0
    %549 = vmatprep.subr.mxu0 0.0
    %550 = vmatpush1.msra.mxu0 0.0
    %551 = vmatprep.subr.mxu0 0.0
    %552 = vmatpush1.msra.mxu0 0.0
    %553 = vmatprep.subr.mxu0 0.0
    %554 = vmatpush1.msra.mxu0 0.0
    %555 = vmatprep.subr.mxu0 0.0
    %556 = vmatpush1.msra.mxu0 0.0
    %557 = vmatprep.subr.mxu0 0.0
    %558 = vmatpush1.msra.mxu0 0.0
    %559 = vmatprep.subr.mxu0 0.0
    %560 = vmatpush1.msra.mxu0 0.0
    %561 = vmatprep.subr.mxu0 0.0
    %562 = vmatpush1.msra.mxu0 0.0
    %563 = vmatprep.subr.mxu0 0.0
    %564 = vmatpush1.msra.mxu0 0.0
    %565 = vmatprep.subr.mxu0 0.0
    %566 = vmatpush1.msra.mxu0 %v529
    %567 = vmatprep.subr.mxu0 0.0
    %568 = vmatpush1.msra.mxu0 %v528
    %569 = vmatprep.subr.mxu0 0.0
    %570 = vmatpush1.msra.mxu0 %v527
    %571 = vmatprep.subr.mxu0 0.0
    %572 = vmatpush1.msra.mxu0 %v526
    %573 = vmatprep.subr.mxu0 0.0
    %574 = vmatpush2.msra.mxu0 0.0
    %575 = vmatprep.subr.mxu0 0.0
    %576 = vmatpush2.msra.mxu0 0.0
    %577 = vmatprep.subr.mxu0 0.0
    %578 = vmatpush2.msra.mxu0 0.0
    %579 = vmatprep.subr.mxu0 0.0
    %580 = vmatpush2.msra.mxu0 0.0
    %581 = vmatprep.subr.mxu0 0.0
    %582 = vmatpush2.msra.mxu0 0.0
    %583 = vmatprep.subr.mxu0 0.0
    %584 = vmatpush2.msra.mxu0 0.0
    %585 = vmatprep.subr.mxu0 0.0
    %586 = vmatpush2.msra.mxu0 0.0
    %587 = vmatprep.subr.mxu0 0.0
    %588 = vmatpush2.msra.mxu0 0.0
    %589 = vmatprep.subr.mxu0 0.0
    %590 = vmatpush2.msra.mxu0 0.0
    %591 = vmatprep.subr.mxu0 0.0
    %592 = vmatpush2.msra.mxu0 0.0
    %593 = vmatprep.subr.mxu0 0.0
    %594 = vmatpush2.msra.mxu0 0.0
    %595 = vmatprep.subr.mxu0 0.0
    %596 = vmatpush2.msra.mxu0 0.0
    %597 = vmatprep.subr.mxu0 0.0
    %598 = vmatpush2.msra.mxu0 0.0
    %599 = vmatprep.subr.mxu0 0.0
    %600 = vmatpush2.msra.mxu0 0.0
    %601 = vmatprep.subr.mxu0 0.0
    %602 = vmatpush2.msra.mxu0 0.0
    %603 = vmatprep.subr.mxu0 0.0
    %604 = vmatpush2.msra.mxu0 0.0
    %605 = vmatprep.mubr.f32.mxu0 0.0
    %606 = vmatmul.mubr.f32.gmra.mxu0 %v539
    %v607 = vpop.f32.mrf.mxu0
    %v608 = vadd.f32 %v536, %v607
    %v609 = vpop.f32.mrf.mxu0
    %610 = vdwg.mxu0
    %v611 = vtanh.pop %v608
    %s612 = scalar_lea.vmem [#allocation7], 160
    %v613 = vld [vmem:[%s612] sm:$0xff]
    %v614 = vld [vmem:[%s612 + $0x8] sm:$0xff]
    %v615 = vld [vmem:[%s612 + $0x10] sm:$0xff]
    %v616 = vld [vmem:[%s612 + $0x18] sm:$0xff]
    %s617 = scalar_lea.vmem [#allocation8], 5
    %v618 = vld [vmem:[%s617] sm:$0x1]
    %v620 = vlaneseq
    %v621 = vshrl.u32 %v620, 7
    %v622 = vsub.s32 0, %v621
    %v623 = vrot.slane %v618, %v622
    %v626 = vsel %vm189, %v611, 0
    %628 = vmatprep.subr.mxu0 0.0
    %629 = vmatpush1.msra.mxu0 0.0
    %630 = vmatprep.subr.mxu0 0.0
    %631 = vmatpush1.msra.mxu0 0.0
    %632 = vmatprep.subr.mxu0 0.0
    %633 = vmatpush1.msra.mxu0 0.0
    %634 = vmatprep.subr.mxu0 0.0
    %635 = vmatpush1.msra.mxu0 0.0
    %636 = vmatprep.subr.mxu0 0.0
    %637 = vmatpush1.msra.mxu0 0.0
    %638 = vmatprep.subr.mxu0 0.0
    %639 = vmatpush1.msra.mxu0 0.0
    %640 = vmatprep.subr.mxu0 0.0
    %641 = vmatpush1.msra.mxu0 0.0
    %642 = vmatprep.subr.mxu0 0.0
    %643 = vmatpush1.msra.mxu0 0.0
    %644 = vmatprep.subr.mxu0 0.0
    %645 = vmatpush1.msra.mxu0 0.0
    %646 = vmatprep.subr.mxu0 0.0
    %647 = vmatpush1.msra.mxu0 0.0
    %648 = vmatprep.subr.mxu0 0.0
    %649 = vmatpush1.msra.mxu0 0.0
    %650 = vmatprep.subr.mxu0 0.0
    %651 = vmatpush1.msra.mxu0 0.0
    %652 = vmatprep.subr.mxu0 0.0
    %653 = vmatpush1.msra.mxu0 %v616
    %654 = vmatprep.subr.mxu0 0.0
    %655 = vmatpush1.msra.mxu0 %v615
    %656 = vmatprep.subr.mxu0 0.0
    %657 = vmatpush1.msra.mxu0 %v614
    %658 = vmatprep.subr.mxu0 0.0
    %659 = vmatpush1.msra.mxu0 %v613
    %660 = vmatprep.subr.mxu0 0.0
    %661 = vmatpush2.msra.mxu0 0.0
    %662 = vmatprep.subr.mxu0 0.0
    %663 = vmatpush2.msra.mxu0 0.0
    %664 = vmatprep.subr.mxu0 0.0
    %665 = vmatpush2.msra.mxu0 0.0
    %666 = vmatprep.subr.mxu0 0.0
    %667 = vmatpush2.msra.mxu0 0.0
    %668 = vmatprep.subr.mxu0 0.0
    %669 = vmatpush2.msra.mxu0 0.0
    %670 = vmatprep.subr.mxu0 0.0
    %671 = vmatpush2.msra.mxu0 0.0
    %672 = vmatprep.subr.mxu0 0.0
    %673 = vmatpush2.msra.mxu0 0.0
    %674 = vmatprep.subr.mxu0 0.0
    %675 = vmatpush2.msra.mxu0 0.0
    %676 = vmatprep.subr.mxu0 0.0
    %677 = vmatpush2.msra.mxu0 0.0
    %678 = vmatprep.subr.mxu0 0.0
    %679 = vmatpush2.msra.mxu0 0.0
    %680 = vmatprep.subr.mxu0 0.0
    %681 = vmatpush2.msra.mxu0 0.0
    %682 = vmatprep.subr.mxu0 0.0
    %683 = vmatpush2.msra.mxu0 0.0
    %684 = vmatprep.subr.mxu0 0.0
    %685 = vmatpush2.msra.mxu0 0.0
    %686 = vmatprep.subr.mxu0 0.0
    %687 = vmatpush2.msra.mxu0 0.0
    %688 = vmatprep.subr.mxu0 0.0
    %689 = vmatpush2.msra.mxu0 0.0
    %690 = vmatprep.subr.mxu0 0.0
    %691 = vmatpush2.msra.mxu0 0.0
    %692 = vmatprep.mubr.f32.mxu0 0.0
    %693 = vmatmul.mubr.f32.gmra.mxu0 %v626
    %v694 = vpop.f32.mrf.mxu0
    %v695 = vadd.f32 %v623, %v694
    %v696 = vpop.f32.mrf.mxu0
    %697 = vdwg.mxu0
    %v698 = vtanh.pop %v695
    %s699 = scalar_lea.vmem [#allocation7], 192
    %v700 = vld [vmem:[%s699] sm:$0xff]
    %v701 = vld [vmem:[%s699 + $0x8] sm:$0xff]
    %v702 = vld [vmem:[%s699 + $0x10] sm:$0xff]
    %v703 = vld [vmem:[%s699 + $0x18] sm:$0xff]
    %s704 = scalar_lea.vmem [#allocation8], 6
    %v705 = vld [vmem:[%s704] sm:$0x1]
    %v707 = vlaneseq
    %v708 = vshrl.u32 %v707, 7
    %v709 = vsub.s32 0, %v708
    %v710 = vrot.slane %v705, %v709
    %v713 = vsel %vm189, %v698, 0
    %715 = vmatprep.subr.mxu0 0.0
    %716 = vmatpush1.msra.mxu0 0.0
    %717 = vmatprep.subr.mxu0 0.0
    %718 = vmatpush1.msra.mxu0 0.0
    %719 = vmatprep.subr.mxu0 0.0
    %720 = vmatpush1.msra.mxu0 0.0
    %721 = vmatprep.subr.mxu0 0.0
    %722 = vmatpush1.msra.mxu0 0.0
    %723 = vmatprep.subr.mxu0 0.0
    %724 = vmatpush1.msra.mxu0 0.0
    %725 = vmatprep.subr.mxu0 0.0
    %726 = vmatpush1.msra.mxu0 0.0
    %727 = vmatprep.subr.mxu0 0.0
    %728 = vmatpush1.msra.mxu0 0.0
    %729 = vmatprep.subr.mxu0 0.0
    %730 = vmatpush1.msra.mxu0 0.0
    %731 = vmatprep.subr.mxu0 0.0
    %732 = vmatpush1.msra.mxu0 0.0
    %733 = vmatprep.subr.mxu0 0.0
    %734 = vmatpush1.msra.mxu0 0.0
    %735 = vmatprep.subr.mxu0 0.0
    %736 = vmatpush1.msra.mxu0 0.0
    %737 = vmatprep.subr.mxu0 0.0
    %738 = vmatpush1.msra.mxu0 0.0
    %739 = vmatprep.subr.mxu0 0.0
    %740 = vmatpush1.msra.mxu0 %v703
    %741 = vmatprep.subr.mxu0 0.0
    %742 = vmatpush1.msra.mxu0 %v702
    %743 = vmatprep.subr.mxu0 0.0
    %744 = vmatpush1.msra.mxu0 %v701
    %745 = vmatprep.subr.mxu0 0.0
    %746 = vmatpush1.msra.mxu0 %v700
    %747 = vmatprep.subr.mxu0 0.0
    %748 = vmatpush2.msra.mxu0 0.0
    %749 = vmatprep.subr.mxu0 0.0
    %750 = vmatpush2.msra.mxu0 0.0
    %751 = vmatprep.subr.mxu0 0.0
    %752 = vmatpush2.msra.mxu0 0.0
    %753 = vmatprep.subr.mxu0 0.0
    %754 = vmatpush2.msra.mxu0 0.0
    %755 = vmatprep.subr.mxu0 0.0
    %756 = vmatpush2.msra.mxu0 0.0
    %757 = vmatprep.subr.mxu0 0.0
    %758 = vmatpush2.msra.mxu0 0.0
    %759 = vmatprep.subr.mxu0 0.0
    %760 = vmatpush2.msra.mxu0 0.0
    %761 = vmatprep.subr.mxu0 0.0
    %762 = vmatpush2.msra.mxu0 0.0
    %763 = vmatprep.subr.mxu0 0.0
    %764 = vmatpush2.msra.mxu0 0.0
    %765 = vmatprep.subr.mxu0 0.0
    %766 = vmatpush2.msra.mxu0 0.0
    %767 = vmatprep.subr.mxu0 0.0
    %768 = vmatpush2.msra.mxu0 0.0
    %769 = vmatprep.subr.mxu0 0.0
    %770 = vmatpush2.msra.mxu0 0.0
    %771 = vmatprep.subr.mxu0 0.0
    %772 = vmatpush2.msra.mxu0 0.0
    %773 = vmatprep.subr.mxu0 0.0
    %774 = vmatpush2.msra.mxu0 0.0
    %775 = vmatprep.subr.mxu0 0.0
    %776 = vmatpush2.msra.mxu0 0.0
    %777 = vmatprep.subr.mxu0 0.0
    %778 = vmatpush2.msra.mxu0 0.0
    %779 = vmatprep.mubr.f32.mxu0 0.0
    %780 = vmatmul.mubr.f32.gmra.mxu0 %v713
    %v781 = vpop.f32.mrf.mxu0
    %v782 = vadd.f32 %v710, %v781
    %v783 = vpop.f32.mrf.mxu0
    %784 = vdwg.mxu0
    %v785 = vtanh.pop %v782
    %s786 = scalar_lea.vmem [#allocation7], 224
    %v787 = vld [vmem:[%s786] sm:$0xff]
    %v788 = vld [vmem:[%s786 + $0x8] sm:$0xff]
    %v789 = vld [vmem:[%s786 + $0x10] sm:$0xff]
    %v790 = vld [vmem:[%s786 + $0x18] sm:$0xff]
    %s791 = scalar_lea.vmem [#allocation8], 7
    %v792 = vld [vmem:[%s791] sm:$0x1]
    %v794 = vlaneseq
    %v795 = vshrl.u32 %v794, 7
    %v796 = vsub.s32 0, %v795
    %v797 = vrot.slane %v792, %v796
    %v800 = vsel %vm189, %v785, 0
    %802 = vmatprep.subr.mxu0 0.0
    %803 = vmatpush1.msra.mxu0 0.0
    %804 = vmatprep.subr.mxu0 0.0
    %805 = vmatpush1.msra.mxu0 0.0
    %806 = vmatprep.subr.mxu0 0.0
    %807 = vmatpush1.msra.mxu0 0.0
    %808 = vmatprep.subr.mxu0 0.0
    %809 = vmatpush1.msra.mxu0 0.0
    %810 = vmatprep.subr.mxu0 0.0
    %811 = vmatpush1.msra.mxu0 0.0
    %812 = vmatprep.subr.mxu0 0.0
    %813 = vmatpush1.msra.mxu0 0.0
    %814 = vmatprep.subr.mxu0 0.0
    %815 = vmatpush1.msra.mxu0 0.0
    %816 = vmatprep.subr.mxu0 0.0
    %817 = vmatpush1.msra.mxu0 0.0
    %818 = vmatprep.subr.mxu0 0.0
    %819 = vmatpush1.msra.mxu0 0.0
    %820 = vmatprep.subr.mxu0 0.0
    %821 = vmatpush1.msra.mxu0 0.0
    %822 = vmatprep.subr.mxu0 0.0
    %823 = vmatpush1.msra.mxu0 0.0
    %824 = vmatprep.subr.mxu0 0.0
    %825 = vmatpush1.msra.mxu0 0.0
    %826 = vmatprep.subr.mxu0 0.0
    %827 = vmatpush1.msra.mxu0 %v790
    %828 = vmatprep.subr.mxu0 0.0
    %829 = vmatpush1.msra.mxu0 %v789
    %830 = vmatprep.subr.mxu0 0.0
    %831 = vmatpush1.msra.mxu0 %v788
    %832 = vmatprep.subr.mxu0 0.0
    %833 = vmatpush1.msra.mxu0 %v787
    %834 = vmatprep.subr.mxu0 0.0
    %835 = vmatpush2.msra.mxu0 0.0
    %836 = vmatprep.subr.mxu0 0.0
    %837 = vmatpush2.msra.mxu0 0.0
    %838 = vmatprep.subr.mxu0 0.0
    %839 = vmatpush2.msra.mxu0 0.0
    %840 = vmatprep.subr.mxu0 0.0
    %841 = vmatpush2.msra.mxu0 0.0
    %842 = vmatprep.subr.mxu0 0.0
    %843 = vmatpush2.msra.mxu0 0.0
    %844 = vmatprep.subr.mxu0 0.0
    %845 = vmatpush2.msra.mxu0 0.0
    %846 = vmatprep.subr.mxu0 0.0
    %847 = vmatpush2.msra.mxu0 0.0
    %848 = vmatprep.subr.mxu0 0.0
    %849 = vmatpush2.msra.mxu0 0.0
    %850 = vmatprep.subr.mxu0 0.0
    %851 = vmatpush2.msra.mxu0 0.0
    %852 = vmatprep.subr.mxu0 0.0
    %853 = vmatpush2.msra.mxu0 0.0
    %854 = vmatprep.subr.mxu0 0.0
    %855 = vmatpush2.msra.mxu0 0.0
    %856 = vmatprep.subr.mxu0 0.0
    %857 = vmatpush2.msra.mxu0 0.0
    %858 = vmatprep.subr.mxu0 0.0
    %859 = vmatpush2.msra.mxu0 0.0
    %860 = vmatprep.subr.mxu0 0.0
    %861 = vmatpush2.msra.mxu0 0.0
    %862 = vmatprep.subr.mxu0 0.0
    %863 = vmatpush2.msra.mxu0 0.0
    %864 = vmatprep.subr.mxu0 0.0
    %865 = vmatpush2.msra.mxu0 0.0
    %866 = vmatprep.mubr.f32.mxu0 0.0
    %867 = vmatmul.mubr.f32.gmra.mxu0 %v800
    %v868 = vpop.f32.mrf.mxu0
    %v869 = vadd.f32 %v797, %v868
    %v870 = vpop.f32.mrf.mxu0
    %871 = vdwg.mxu0
    %v872 = vtanh.pop %v869
    %v873 = vld [vmem:[#allocation10] sm:$0xff]
    %v874 = vld [vmem:[#allocation10 + $0x8] sm:$0xff]
    %v875 = vld [vmem:[#allocation10 + $0x10] sm:$0xff]
    %v876 = vld [vmem:[#allocation10 + $0x18] sm:$0xff]
    %v877 = vld [vmem:[%s6] sm:$0x1]
    %v879 = vlaneseq
    %v880 = vshrl.u32 %v879, 7
    %v881 = vsub.s32 0, %v880
    %v882 = vrot.slane %v877, %v881
    %v885 = vsel %vm189, %v872, 0
    %887 = vmatprep.subr.mxu0 0.0
    %888 = vmatpush1.msra.mxu0 0.0
    %889 = vmatprep.subr.mxu0 0.0
    %890 = vmatpush1.msra.mxu0 0.0
    %891 = vmatprep.subr.mxu0 0.0
    %892 = vmatpush1.msra.mxu0 0.0
    %893 = vmatprep.subr.mxu0 0.0
    %894 = vmatpush1.msra.mxu0 0.0
    %895 = vmatprep.subr.mxu0 0.0
    %896 = vmatpush1.msra.mxu0 0.0
    %897 = vmatprep.subr.mxu0 0.0
    %898 = vmatpush1.msra.mxu0 0.0
    %899 = vmatprep.subr.mxu0 0.0
    %900 = vmatpush1.msra.mxu0 0.0
    %901 = vmatprep.subr.mxu0 0.0
    %902 = vmatpush1.msra.mxu0 0.0
    %903 = vmatprep.subr.mxu0 0.0
    %904 = vmatpush1.msra.mxu0 0.0
    %905 = vmatprep.subr.mxu0 0.0
    %906 = vmatpush1.msra.mxu0 0.0
    %907 = vmatprep.subr.mxu0 0.0
    %908 = vmatpush1.msra.mxu0 0.0
    %909 = vmatprep.subr.mxu0 0.0
    %910 = vmatpush1.msra.mxu0 0.0
    %911 = vmatprep.subr.mxu0 0.0
    %912 = vmatpush1.msra.mxu0 %v876
    %913 = vmatprep.subr.mxu0 0.0
    %914 = vmatpush1.msra.mxu0 %v875
    %915 = vmatprep.subr.mxu0 0.0
    %916 = vmatpush1.msra.mxu0 %v874
    %917 = vmatprep.subr.mxu0 0.0
    %918 = vmatpush1.msra.mxu0 %v873
    %919 = vmatprep.subr.mxu0 0.0
    %920 = vmatpush2.msra.mxu0 0.0
    %921 = vmatprep.subr.mxu0 0.0
    %922 = vmatpush2.msra.mxu0 0.0
    %923 = vmatprep.subr.mxu0 0.0
    %924 = vmatpush2.msra.mxu0 0.0
    %925 = vmatprep.subr.mxu0 0.0
    %926 = vmatpush2.msra.mxu0 0.0
    %927 = vmatprep.subr.mxu0 0.0
    %928 = vmatpush2.msra.mxu0 0.0
    %929 = vmatprep.subr.mxu0 0.0
    %930 = vmatpush2.msra.mxu0 0.0
    %931 = vmatprep.subr.mxu0 0.0
    %932 = vmatpush2.msra.mxu0 0.0
    %933 = vmatprep.subr.mxu0 0.0
    %934 = vmatpush2.msra.mxu0 0.0
    %935 = vmatprep.subr.mxu0 0.0
    %936 = vmatpush2.msra.mxu0 0.0
    %937 = vmatprep.subr.mxu0 0.0
    %938 = vmatpush2.msra.mxu0 0.0
    %939 = vmatprep.subr.mxu0 0.0
    %940 = vmatpush2.msra.mxu0 0.0
    %941 = vmatprep.subr.mxu0 0.0
    %942 = vmatpush2.msra.mxu0 0.0
    %943 = vmatprep.subr.mxu0 0.0
    %944 = vmatpush2.msra.mxu0 0.0
    %945 = vmatprep.subr.mxu0 0.0
    %946 = vmatpush2.msra.mxu0 0.0
    %947 = vmatprep.subr.mxu0 0.0
    %948 = vmatpush2.msra.mxu0 0.0
    %949 = vmatprep.subr.mxu0 0.0
    %950 = vmatpush2.msra.mxu0 0.0
    %951 = vmatprep.mubr.f32.mxu0 0.0
    %952 = vmatmul.mubr.f32.gmra.mxu0 %v885
    %v953 = vpop.f32.mrf.mxu0
    %v954 = vadd.f32 %v882, %v953
    %v955 = vpop.f32.mrf.mxu0
    %956 = vdwg.mxu0
    %957 = vst [vmem:[#allocation11] sm:$0xff] %v954
    // Predicated region
    $region50: #{tpu_custom_call.1} parent=1 // pred_check
      _
    $region51: #{tpu_custom_call.1} parent=1 // pred_check_branch
      %959 = sbr.rel (0) target = $region53
    $region52: #{tpu_custom_call.1} parent=1 // pred_region
      %s961 = ssub.s32 128, 128
      %962 = vsyncadd [#allocation4], %s961
      %s964 = sshll.u32 [#allocation11], 4
      %s965 = int_to_ptr.vmem [resolvable:$true] %s964
      %967 = dma.vmem_to_hbm [thread:$0]  %s965, 128, %s7, [#allocation4]
    $region53: #{tpu_custom_call.1} parent=1 // pred_fallthru
      _
    // Predicated region
    $region54: #{tpu_custom_call.1} parent=1 // pred_check
      _
    $region55: #{tpu_custom_call.1} parent=1 // pred_check_branch
      %969 = sbr.rel (0) target = $region57
    $region56: #{tpu_custom_call.1} parent=1 // pred_region
      %970 = dma.done [#allocation4], 128
    $region57: #{tpu_custom_call.1} parent=1 // pred_fallthru
      _
    %971 = vsyncpa [#allocation3], 1
    %972 = vsyncpa [#allocation6], 1
    %973 = vsyncpa [#allocation9], 1
    %974 = vsyncpa [#allocation4], 1

</llo_original>
